<compile_context>
chip_gen: v5e
topology: v5e:2x2
jax: 0.10.0
libtpu: 0.0.40
codegen_flags: <defaults>
</compile_context>

<pallas_src>
import math
from functools import partial

import numpy as np
import jax
import jax.numpy as jnp
from jax.experimental import pallas as pl
from jax.experimental.pallas import tpu as pltpu


def _nerf_kernel(x_ref, scale_ref, phase_ref, o_ref, *, n_layers):
    # x_ref     : (C, TN)        one batch, TN flattened-spatial columns
    # scale_ref : (d_out, 1)     per-output-row frequency  (2^i * pi)
    # phase_ref : (d_out, 1)     per-output-row phase      (0 for sin, pi/2 for cos)
    # o_ref     : (d_out, TN)    output block, already in final channel order
    x = x_ref[...].astype(jnp.float32)               # single upcast (v5e bf16)
    xt = jnp.tile(x, (2 * n_layers, 1))               # (d_out, TN), sublane-dense
    # cos(z) = sin(z + pi/2): one transcendental pass + one full unmasked store.
    val = jnp.sin(xt * scale_ref[...] + phase_ref[...])
    o_ref[...] = val.astype(o_ref.dtype)


def nerf_embedding(spatial_coords, n_layers=5):
    """spatial_coords: (B, C, *spatial) -> (B, 2*n_layers*C, *spatial)."""
    B, C = spatial_coords.shape[0], spatial_coords.shape[1]
    spatial = spatial_coords.shape[2:]
    N = 1
    for s in spatial:
        N *= int(s)
    d_out = 2 * n_layers * C
    dtype = spatial_coords.dtype
    itemsize = int(jnp.dtype(dtype).itemsize)

    # Free reshape: flatten trailing spatial dims so the last dim is lane-dense.
    x2 = spatial_coords.reshape(B, C, N)

    # Pad the (small, 1x) input up to a lane multiple so every block — in
    # particular the 10x-sized output — keeps an unmasked, 128-aligned last
    # dim and we never fall back to a huge full-N block (v7x 64 MiB VMEM).
    LANE = 128
    Npad = ((N + LANE - 1) // LANE) * LANE
    if Npad != N:
        x2 = jnp.pad(x2, ((0, 0), (0, 0), (0, Npad - N)))

    # Largest 128-multiple tile that divides Npad (any multiple, not just
    # powers of two), capped at 8192 lanes; when B == 1, also capped so the
    # spatial grid axis keeps >= 2 steps (both v7x TensorCores busy).
    MAX_TN = 8192
    cap = min(MAX_TN, Npad)
    if B == 1:
        cap = min(cap, max(LANE, (Npad // 2) // LANE * LANE))
    TN = LANE
    cand = (cap // LANE) * LANE
    while cand >= LANE:
        if Npad % cand == 0:
            TN = cand
            break
        cand -= LANE

    # Per-output-row frequency / phase columns (host-precomputed constants).
    # Row order matches torch.cat: [sin_0(ch0..chC-1), cos_0(...), sin_1, ...].
    freqs = np.array([(2.0 ** i) * math.pi for i in range(n_layers)], dtype=np.float64)
    scale_rows = np.repeat(freqs, 2 * C)                                  # (d_out,)
    phase_rows = np.tile(np.repeat(np.array([0.0, math.pi / 2.0]), C), n_layers)
    scale = jnp.asarray(scale_rows.reshape(d_out, 1), dtype=jnp.float32)
    phase = jnp.asarray(phase_rows.reshape(d_out, 1), dtype=jnp.float32)

    grid = (B, Npad // TN)
    out = pl.pallas_call(
        partial(_nerf_kernel, n_layers=n_layers),
        out_shape=jax.ShapeDtypeStruct((B, d_out, Npad), dtype),
        grid_spec=pl.GridSpec(
            grid=grid,
            in_specs=[
                pl.BlockSpec((pl.Squeezed(), C, TN), lambda b, n: (b, 0, n)),
                pl.BlockSpec((d_out, 1), lambda b, n: (0, 0)),
                pl.BlockSpec((d_out, 1), lambda b, n: (0, 0)),
            ],
            out_specs=pl.BlockSpec((pl.Squeezed(), d_out, TN),
                                   lambda b, n: (b, 0, n)),
        ),
        compiler_params=pltpu.CompilerParams(
            dimension_semantics=("parallel", "parallel"),
        ),
        cost_estimate=pl.CostEstimate(
            flops=4 * B * d_out * Npad,
            transcendentals=B * d_out * Npad,
            bytes_accessed=(B * C * Npad + B * d_out * Npad) * itemsize,
        ),
    )(x2, scale, phase)

    if Npad != N:
        out = out[:, :, :N]

    # Free reshape back to the module's (B, 2*n_layers*C, H, W) layout.
    return out.reshape((B, d_out) + spatial)


def _reference(x, n_layers=5):
    """Plain-JAX reference of the PyTorch forward for verification."""
    outs = []
    for i in range(n_layers):
        outs.append(jnp.sin((2.0 ** i) * jnp.pi * x))
        outs.append(jnp.cos((2.0 ** i) * jnp.pi * x))
    return jnp.concatenate(outs, axis=1)


if __name__ == "__main__":
    B, C, H, W = 2, 2, 16, 16        # 2 coordinate channels -> dim = n_layers*4
    N_LAYERS = 5

    key = jax.random.PRNGKey(0)
    coords = jax.random.uniform(key, (B, C, H, W), dtype=jnp.float32)

    out = nerf_embedding(coords, n_layers=N_LAYERS)
    out = jax.block_until_ready(out)

    ref = _reference(coords, N_LAYERS)
    assert out.shape == (B, 2 * N_LAYERS * C, H, W)
    assert jnp.allclose(out, ref, atol=1e-4, rtol=1e-4)

    print("KERNEL_OK")
</pallas_src>

<mosaic_0001>
module attributes {stable_mosaic.version = 11 : i64} {
  func.func @_nerf_kernel(%arg0: i32, %arg1: i32, %arg2: memref<1x2x256xf32, #tpu.memory_space<vmem>>, %arg3: memref<20x1xf32, #tpu.memory_space<vmem>>, %arg4: memref<20x1xf32, #tpu.memory_space<vmem>>, %arg5: memref<1x20x256xf32, #tpu.memory_space<vmem>>) attributes {dimension_semantics = [#tpu.dimension_semantics<parallel>, #tpu.dimension_semantics<parallel>], iteration_bounds = array<i64: 2, 1>, scalar_prefetch = 0 : i64, scratch_operands = 0 : i64, tpu.core_type = #tpu.core_type<tc>, window_params = [{transform_indices = @transform_0, window_bounds = array<i64: 1, 2, 256>}, {pipeline_mode = #tpu.pipeline_mode<synchronous>, transform_indices = @transform_1, window_bounds = array<i64: 20, 1>}, {pipeline_mode = #tpu.pipeline_mode<synchronous>, transform_indices = @transform_2, window_bounds = array<i64: 20, 1>}, {transform_indices = @transform_3, window_bounds = array<i64: 1, 20, 256>}]} {
    %c0 = arith.constant 0 : index
    %c0_0 = arith.constant 0 : index
    %c0_1 = arith.constant 0 : index
    %0 = vector.load %arg2[%c0, %c0_0, %c0_1] : memref<1x2x256xf32, #tpu.memory_space<vmem>>, vector<1x2x256xf32>
    %1 = vector.shape_cast %0 : vector<1x2x256xf32> to vector<2x256xf32>
    %2 = tpu.concatenate %1, %1, %1, %1, %1, %1, %1, %1, %1, %1 in 0 : vector<2x256xf32>, vector<2x256xf32>, vector<2x256xf32>, vector<2x256xf32>, vector<2x256xf32>, vector<2x256xf32>, vector<2x256xf32>, vector<2x256xf32>, vector<2x256xf32>, vector<2x256xf32> -> vector<20x256xf32>
    %c0_2 = arith.constant 0 : index
    %c0_3 = arith.constant 0 : index
    %3 = vector.load %arg3[%c0_2, %c0_3] : memref<20x1xf32, #tpu.memory_space<vmem>>, vector<20x1xf32>
    %4 = vector.broadcast %3 : vector<20x1xf32> to vector<20x256xf32>
    %5 = arith.mulf %2, %4 : vector<20x256xf32>
    %c0_4 = arith.constant 0 : index
    %c0_5 = arith.constant 0 : index
    %6 = vector.load %arg4[%c0_4, %c0_5] : memref<20x1xf32, #tpu.memory_space<vmem>>, vector<20x1xf32>
    %7 = vector.broadcast %6 : vector<20x1xf32> to vector<20x256xf32>
    %8 = arith.addf %5, %7 : vector<20x256xf32>
    %9 = math.sin %8 : vector<20x256xf32>
    %c0_6 = arith.constant 0 : index
    %c0_7 = arith.constant 0 : index
    %c0_8 = arith.constant 0 : index
    %10 = vector.load %arg5[%c0_6, %c0_7, %c0_8] : memref<1x20x256xf32, #tpu.memory_space<vmem>>, vector<1x20x256xf32>
    %11 = vector.shape_cast %10 : vector<1x20x256xf32> to vector<20x256xf32>
    %12 = vector.shape_cast %9 : vector<20x256xf32> to vector<1x20x256xf32>
    tpu.vector_store %arg5[%c0_6, %c0_7, %c0_8], %12 {strides = array<i32>} : memref<1x20x256xf32, #tpu.memory_space<vmem>>, vector<1x20x256xf32>,
    return
  }
  func.func @transform_0(%arg0: i32, %arg1: i32) -> (i32, i32, i32) {
    %c0_i32 = arith.constant 0 : i32
    %c0_i32_0 = arith.constant 0 : i32
    return %arg0, %c0_i32, %arg1 : i32, i32, i32
  }
  func.func @transform_1(%arg0: i32, %arg1: i32) -> (i32, i32) {
    %c0_i32 = arith.constant 0 : i32
    %c0_i32_0 = arith.constant 0 : i32
    %c0_i32_1 = arith.constant 0 : i32
    return %c0_i32, %c0_i32_0 : i32, i32
  }
  func.func @transform_2(%arg0: i32, %arg1: i32) -> (i32, i32) {
    %c0_i32 = arith.constant 0 : i32
    %c0_i32_0 = arith.constant 0 : i32
    %c0_i32_1 = arith.constant 0 : i32
    return %c0_i32, %c0_i32_0 : i32, i32
  }
  func.func @transform_3(%arg0: i32, %arg1: i32) -> (i32, i32, i32) {
    %c0_i32 = arith.constant 0 : i32
    %c0_i32_0 = arith.constant 0 : i32
    return %arg0, %c0_i32, %arg1 : i32, i32, i32
  }
}

</mosaic_0001>

<llo_original>
// kernel: tpu_custom_call.1
$region0: #{tpu_custom_call.1}
  #allocation0 [shape = 'u32[]', space=smem, size = 0x4, offset = 0x4, fixed_abs, tag = 'smem constant byte address 0x4 - core index']
  #allocation1 [shape = 'u32[72,128]{1,0:T(1,128)}', space=vmem, size = 0x9000, scoped, tag = 'internal scratch']
  %s0 = inlined_call_operand.vmem [shape: f32[2,2,256], index: 0, kind: input, shape index: {}]
  %s1 = inlined_call_operand.vmem [shape: f32[20,1], index: 1, kind: input, shape index: {}]
  %s2 = inlined_call_operand.vmem [shape: f32[20,1], index: 2, kind: input, shape index: {}]
  %s3 = inlined_call_operand.vmem [shape: f32[2,20,256], index: 3, kind: output, shape index: {}]
  %s4 = sld [smem:[#allocation0]]
  $region45: #{tpu_custom_call.1} parent=0
    _
  %s6 = ssub.s32 1, %s4
  %s7 = scalar_select 0, %s6, %s4
  loop: start=0, step=1, limit=4
  $region2: #{tpu_custom_call.1} parent=0 // loop_pre_header
    _
  $region3: #{tpu_custom_call.1} parent=0 // loop_header
    %s9 = sphi 0, %s13
    %p10 = scmp.ge.s32.totalorder %s9, 4
    %s16 = sphi 0, %s28
    %s17 = sphi 0, %s24
    %s18 = sphi 0, %s16
    %s19 = sphi 0, %s17
    %s20 = sphi 0, %s18
    %s21 = sphi 0, %s19
    %s33 = sphi 0, %s35
    %s36 = sphi 0, %s33
    %s37 = sphi 0, %s36
    %s53 = sphi 0, %s37
    %s57 = sphi 0, %s57
    %s59 = sphi 0, %s57
    %s60 = sphi 0, %s59
    %s74 = sphi 0, %s60
    %s78 = sphi 0, %s78
    %s80 = sphi 0, %s78
    %s81 = sphi 0, %s80
    %s95 = sphi 0, %s81
    %s103 = sphi 0, %s105
    %s106 = sphi 0, %s103
    %s107 = sphi 0, %s106
    %s123 = sphi 0, %s107
  $region4: #{tpu_custom_call.1} parent=0 // loop_header_branch
    %12 = sbr.rel (%p10) target = $region8
  $region5: #{tpu_custom_call.1} parent=0 // loop_body
    %s14 = ssub.s32 %s9, 1
    %s15 = ssub.s32 %s9, 2
    %s22 = sadd.s32 1, %s17
    %p23 = scmp.ge.s32.totalorder %s22, 1
    %s24 = scalar_select %p23, 0, %s22
    %s25 = sadd.s32 1, %s16
    %s26 = scalar_select %p23, %s25, %s16
    %p27 = scmp.ge.s32.totalorder %s26, 2
    %s28 = scalar_select %p27, 0, %s26
    %s29 = ssub.s32 %s16, %s28
    %s30 = ssub.s32 %s17, %s24
    %s31 = sor.u32 %s29, %s30
    %p32 = scmp.eq.s32.totalorder %s31, 0
    %s34 = sadd.s32 %s33, 1
    %s35 = scalar_select %p32, %s33, %s34
    %p38 = pneg %p32
    %p39 = scmp.eq.s32.totalorder %s9, 1
    %p40 = por %p38, %p39
    %p41 = scmp.ne.s32.totalorder %s33, %s36
    %p42 = scmp.eq.s32.totalorder %s9, 0
    %p43 = por %p41, %p42
    %p44 = scmp.ne.s32.totalorder %s33, %s36
    %p45 = scmp.eq.s32.totalorder %s14, 1
    %p46 = por %p44, %p45
    %p47 = scmp.ne.s32.totalorder %s36, %s37
    %p48 = scmp.eq.s32.totalorder %s14, 0
    %p49 = por %p47, %p48
    %p50 = scmp.ne.s32.totalorder %s36, %s37
    %p51 = scmp.eq.s32.totalorder %s15, 1
    %p52 = por %p50, %p51
    %p54 = scmp.ne.s32.totalorder %s37, %s53
    %p55 = scmp.eq.s32.totalorder %s15, 0
    %p56 = por %p54, %p55
    %s58 = sadd.s32 %s57, 1
    %p61 = scmp.eq.s32.totalorder %s9, 1
    %p62 = scmp.ne.s32.totalorder %s57, %s59
    %p63 = scmp.eq.s32.totalorder %s9, 0
    %p64 = por %p62, %p63
    %p65 = scmp.ne.s32.totalorder %s57, %s59
    %p66 = scmp.eq.s32.totalorder %s14, 1
    %p67 = por %p65, %p66
    %p68 = scmp.ne.s32.totalorder %s59, %s60
    %p69 = scmp.eq.s32.totalorder %s14, 0
    %p70 = por %p68, %p69
    %p71 = scmp.ne.s32.totalorder %s59, %s60
    %p72 = scmp.eq.s32.totalorder %s15, 1
    %p73 = por %p71, %p72
    %p75 = scmp.ne.s32.totalorder %s60, %s74
    %p76 = scmp.eq.s32.totalorder %s15, 0
    %p77 = por %p75, %p76
    %s79 = sadd.s32 %s78, 1
    %p82 = scmp.eq.s32.totalorder %s9, 1
    %p83 = scmp.ne.s32.totalorder %s78, %s80
    %p84 = scmp.eq.s32.totalorder %s9, 0
    %p85 = por %p83, %p84
    %p86 = scmp.ne.s32.totalorder %s78, %s80
    %p87 = scmp.eq.s32.totalorder %s14, 1
    %p88 = por %p86, %p87
    %p89 = scmp.ne.s32.totalorder %s80, %s81
    %p90 = scmp.eq.s32.totalorder %s14, 0
    %p91 = por %p89, %p90
    %p92 = scmp.ne.s32.totalorder %s80, %s81
    %p93 = scmp.eq.s32.totalorder %s15, 1
    %p94 = por %p92, %p93
    %p96 = scmp.ne.s32.totalorder %s81, %s95
    %p97 = scmp.eq.s32.totalorder %s15, 0
    %p98 = por %p96, %p97
    %s99 = ssub.s32 %s16, %s28
    %s100 = ssub.s32 %s17, %s24
    %s101 = sor.u32 %s99, %s100
    %p102 = scmp.eq.s32.totalorder %s101, 0
    %s104 = sadd.s32 %s103, 1
    %s105 = scalar_select %p102, %s103, %s104
    %p108 = pneg %p102
    %p109 = scmp.eq.s32.totalorder %s9, 1
    %p110 = por %p108, %p109
    %p111 = scmp.ne.s32.totalorder %s103, %s106
    %p112 = scmp.eq.s32.totalorder %s9, 0
    %p113 = por %p111, %p112
    %p114 = scmp.ne.s32.totalorder %s103, %s106
    %p115 = scmp.eq.s32.totalorder %s14, 1
    %p116 = por %p114, %p115
    %p117 = scmp.ne.s32.totalorder %s106, %s107
    %p118 = scmp.eq.s32.totalorder %s14, 0
    %p119 = por %p117, %p118
    %p120 = scmp.ne.s32.totalorder %s106, %s107
    %p121 = scmp.eq.s32.totalorder %s15, 1
    %p122 = por %p120, %p121
    %p124 = scmp.ne.s32.totalorder %s107, %s123
    %p125 = scmp.eq.s32.totalorder %s15, 0
    %p126 = por %p124, %p125
    %p127 = scmp.le.s32.totalorder 1, %s9
    %p128 = scmp.lt.s32.totalorder %s9, 3
    %p129 = pnand %p127, %p128
    %p130 = pneg %p129
    // Predicated region
    $region9: #{tpu_custom_call.1} parent=5 // pred_check
      _
    $region10: #{tpu_custom_call.1} parent=5 // pred_check_branch
      %132 = sbr.rel (%p129) target = $region12
    $region11: #{tpu_custom_call.1} parent=5 // pred_region
      %s133 = ssub.s32 %s9, 1
      // Predicated region
      $region13: #{tpu_custom_call.1} parent=11 // pred_check
        %p134 = pneg %p70
      $region14: #{tpu_custom_call.1} parent=11 // pred_check_branch
        %136 = sbr.rel (%p134) target = $region16
      $region15: #{tpu_custom_call.1} parent=11 // pred_region
        _
      $region16: #{tpu_custom_call.1} parent=11 // pred_fallthru
        _
      // Predicated region
      $region17: #{tpu_custom_call.1} parent=11 // pred_check
        %p137 = pneg %p91
      $region18: #{tpu_custom_call.1} parent=11 // pred_check_branch
        %139 = sbr.rel (%p137) target = $region20
      $region19: #{tpu_custom_call.1} parent=11 // pred_region
        _
      $region20: #{tpu_custom_call.1} parent=11 // pred_fallthru
        _
    $region12: #{tpu_custom_call.1} parent=5 // pred_fallthru
      _
    %p140 = scmp.lt.s32.totalorder %s9, 2
    // Predicated region
    $region21: #{tpu_custom_call.1} parent=5 // pred_check
      %p141 = pneg %p140
    $region22: #{tpu_custom_call.1} parent=5 // pred_check_branch
      %143 = sbr.rel (%p141) target = $region24
    $region23: #{tpu_custom_call.1} parent=5 // pred_region
      // Predicated region
      $region25: #{tpu_custom_call.1} parent=23 // pred_check
        %p144 = pneg %p43
      $region26: #{tpu_custom_call.1} parent=23 // pred_check_branch
        %146 = sbr.rel (%p144) target = $region28
      $region27: #{tpu_custom_call.1} parent=23 // pred_region
        %s147 = smul.u32 2, %s17
        %p148 = scmp.lt.s32.totalorder %s16, 1
        %s149 = scalar_select %p148, %s16, 1
        %p150 = scmp.lt.s32.totalorder %s147, 1
        %s151 = scalar_select %p150, %s147, 1
        %s152 = smul.addr %s149, 2
        %s153 = sadd.s32 %s151, %s152
        %s154 = smul.addr %s153, 2
        %s155 = scalar_lea.vmem %s0, %s154
        %s156 = smul.u32 2, %s17
      $region28: #{tpu_custom_call.1} parent=23 // pred_fallthru
        _
    $region24: #{tpu_custom_call.1} parent=5 // pred_fallthru
      _
    %p157 = scmp.le.s32.totalorder 1, %s9
    %p158 = scmp.lt.s32.totalorder %s9, 3
    %p159 = pnand %p157, %p158
    %p160 = pneg %p159
    // Predicated region
    $region29: #{tpu_custom_call.1} parent=5 // pred_check
      _
    $region30: #{tpu_custom_call.1} parent=5 // pred_check_branch
      %162 = sbr.rel (%p159) target = $region32
    $region31: #{tpu_custom_call.1} parent=5 // pred_region
      %s163 = ssub.s32 %s9, 1
      %s164 = smul.u32 2, %s19
      %p165 = scmp.lt.s32.totalorder %s18, 1
      %s166 = scalar_select %p165, %s18, 1
      %p167 = scmp.lt.s32.totalorder %s164, 1
      %s168 = scalar_select %p167, %s164, 1
      %s169 = smul.addr %s166, 2
      %s170 = sadd.s32 %s168, %s169
      %s171 = smul.addr %s170, 2
      %s172 = scalar_lea.vmem %s0, %s171
      %p173 = pneg %p49
      %p174 = pneg %p46
      %p175 = pneg %p70
      %p176 = pneg %p67
      %p177 = pneg %p91
      %p178 = pneg %p88
      %p179 = pneg %p119
      %p180 = pneg %p116
      %s181 = smul.u32 2, %s19
      %p182 = scmp.lt.s32.totalorder %s18, 1
      %s183 = scalar_select %p182, %s18, 1
      %p184 = scmp.lt.s32.totalorder %s181, 1
      %s185 = scalar_select %p184, %s181, 1
      %s186 = smul.addr %s183, 6
      %s187 = sadd.s32 %s185, %s186
      %s188 = smul.addr %s187, 8
      %s189 = scalar_lea.vmem %s3, %s188
      %s190 = smul.u32 2, %s19
      %p191 = scmp.lt.s32.totalorder %s18, 1
      %s192 = scalar_select %p191, %s18, 1
      %p193 = scmp.lt.s32.totalorder %s190, 1
      %s194 = scalar_select %p193, %s190, 1
      %s195 = smul.addr %s192, 2
      %s196 = sadd.s32 %s194, %s195
      %s197 = smul.addr %s196, 2
      %s198 = scalar_lea.vmem %s0, %s197
      %s199 = smul.u32 2, %s19
      %s200 = smul.u32 2, %s19
      %p201 = scmp.lt.s32.totalorder %s18, 1
      %s202 = scalar_select %p201, %s18, 1
      %p203 = scmp.lt.s32.totalorder %s200, 1
      %s204 = scalar_select %p203, %s200, 1
      %s205 = smul.addr %s202, 6
      %s206 = sadd.s32 %s204, %s205
      %s207 = smul.addr %s206, 8
      %s208 = scalar_lea.vmem %s3, %s207
      %s209 = smul.u32 2, %s19
      %v210 = vld [vmem:[%s198] sm:$0xf]
      %212 = vst [vmem:[#allocation1] ss:$4 sm:$0xff] %v210
      %v213 = vld.sshfl [vmem:[#allocation1] sm:$0xff pattern:$0x73625140]
      %v214 = vld.sshfl [vmem:[#allocation1 + $0x8] sm:$0xff pattern:$0x73625140]
      %s217 = scalar_lea.vmem [#allocation1], 1
      %218 = vst [vmem:[%s217] ss:$4 sm:$0xff] %v210
      %v219 = vld.sshfl [vmem:[#allocation1] sm:$0xff pattern:$0x73625140]
      %v220 = vld.sshfl [vmem:[#allocation1 + $0x8] sm:$0xff pattern:$0x73625140]
      %s223 = scalar_lea.vmem [#allocation1], 2
      %224 = vst [vmem:[%s223] ss:$4 sm:$0xff] %v210
      %v225 = vld.sshfl [vmem:[#allocation1] sm:$0xff pattern:$0x73625140]
      %v226 = vld.sshfl [vmem:[#allocation1 + $0x8] sm:$0xff pattern:$0x73625140]
      %s229 = scalar_lea.vmem [#allocation1], 3
      %230 = vst [vmem:[%s229] ss:$4 sm:$0xff] %v210
      %v231 = vld.sshfl [vmem:[#allocation1] sm:$0xff pattern:$0x73625140]
      %v232 = vld.sshfl [vmem:[#allocation1 + $0x8] sm:$0xff pattern:$0x73625140]
      %235 = vst [vmem:[#allocation1] ss:$4 sm:$0xff] %v210
      %v236 = vld.sshfl [vmem:[#allocation1] sm:$0xff pattern:$0x73625140]
      %v237 = vld.sshfl [vmem:[#allocation1 + $0x8] sm:$0xff pattern:$0x73625140]
      %s240 = scalar_lea.vmem [#allocation1], 1
      %241 = vst [vmem:[%s240] ss:$4 sm:$0xff] %v210
      %v242 = vld.sshfl [vmem:[#allocation1] sm:$0xff pattern:$0x73625140]
      %v243 = vld.sshfl [vmem:[#allocation1 + $0x8] sm:$0xff pattern:$0x73625140]
      %s246 = scalar_lea.vmem [#allocation1], 2
      %247 = vst [vmem:[%s246] ss:$4 sm:$0xff] %v210
      %v248 = vld.sshfl [vmem:[#allocation1] sm:$0xff pattern:$0x73625140]
      %v249 = vld.sshfl [vmem:[#allocation1 + $0x8] sm:$0xff pattern:$0x73625140]
      %s252 = scalar_lea.vmem [#allocation1], 3
      %253 = vst [vmem:[%s252] ss:$4 sm:$0xff] %v210
      %v254 = vld.sshfl [vmem:[#allocation1] sm:$0xff pattern:$0x73625140]
      %v255 = vld.sshfl [vmem:[#allocation1 + $0x8] sm:$0xff pattern:$0x73625140]
      %258 = vst [vmem:[#allocation1] ss:$4 sm:$0xff] %v210
      %v259 = vld.sshfl [vmem:[#allocation1] sm:$0xff pattern:$0x73625140]
      %v260 = vld.sshfl [vmem:[#allocation1 + $0x8] sm:$0xff pattern:$0x73625140]
      %s263 = scalar_lea.vmem [#allocation1], 1
      %264 = vst [vmem:[%s263] ss:$4 sm:$0xff] %v210
      %v265 = vld.sshfl [vmem:[#allocation1] sm:$0xff pattern:$0x73625140]
      %v266 = vld.sshfl [vmem:[#allocation1 + $0x8] sm:$0xff pattern:$0x73625140]
      %vm269 = vcmask 1041408
      %v270 = vsel %vm269, %v213, %v219
      %v271 = vsel %vm269, %v214, %v220
      %vm272 = vcmask 1043456
      %v273 = vsel %vm272, %v270, %v225
      %v274 = vsel %vm272, %v271, %v226
      %vm275 = vcmask 1045504
      %v276 = vsel %vm275, %v273, %v231
      %v277 = vsel %vm275, %v274, %v232
      %v278 = vsel %vm269, %v236, %v242
      %v279 = vsel %vm269, %v237, %v243
      %v280 = vsel %vm272, %v278, %v248
      %v281 = vsel %vm272, %v279, %v249
      %v282 = vsel %vm275, %v280, %v254
      %v283 = vsel %vm275, %v281, %v255
      %v284 = vsel %vm269, %v259, %v265
      %v285 = vsel %vm269, %v260, %v266
      %v286 = vld [vmem:[%s1] sm:$0xff]
      %v287 = vld [vmem:[%s1 + $0x8] sm:$0xff]
      %v288 = vld [vmem:[%s1 + $0x10] sm:$0xf]
      %290 = vset.pattern.permute.xlu0 0
      %291 = vperm.xlu0 %290, %v286
      %v292 = vpop.permute.xlu0 %291
      %295 = vset.pattern.permute.xlu0 0
      %296 = vperm.xlu0 %295, %v287
      %v297 = vpop.permute.xlu0 %296
      %300 = vset.pattern.permute.xlu0 0
      %301 = vperm.xlu0 %300, %v288
      %v302 = vpop.permute.xlu0 %301
      %v304 = vmul.f32 %v276, %v292
      %v305 = vmul.f32 %v277, %v292
      %v306 = vmul.f32 %v282, %v297
      %v307 = vmul.f32 %v283, %v297
      %v308 = vmul.f32 %v284, %v302
      %v309 = vmul.f32 %v285, %v302
      %v310 = vld [vmem:[%s2] sm:$0xff]
      %v311 = vld [vmem:[%s2 + $0x8] sm:$0xff]
      %v312 = vld [vmem:[%s2 + $0x10] sm:$0xf]
      %314 = vset.pattern.permute.xlu0 0
      %315 = vperm.xlu0 %314, %v310
      %v316 = vpop.permute.xlu0 %315
      %319 = vset.pattern.permute.xlu0 0
      %320 = vperm.xlu0 %319, %v311
      %v321 = vpop.permute.xlu0 %320
      %324 = vset.pattern.permute.xlu0 0
      %325 = vperm.xlu0 %324, %v312
      %v326 = vpop.permute.xlu0 %325
      %v328 = vadd.f32 %v304, %v316
      %v329 = vadd.f32 %v305, %v316
      %v330 = vadd.f32 %v306, %v321
      %v331 = vadd.f32 %v307, %v321
      %v332 = vadd.f32 %v308, %v326
      %v333 = vadd.f32 %v309, %v326
      %v334 = vand.u32 2147483647, %v328
      %vm335 = vcmp.le.f32.partialorder %v334, 0.7853982
      %vm336 = vcmp.lt.s32.totalorder %v328, 0
      %v337 = vand.u32 %v328, 2139095040
      %v338 = vshrl.u32 %v337, 23
      %v339 = vsub.s32 %v338, 127
      %v340 = vand.u32 2147483647, %v328
      %v341 = vand.u32 %v340, 8388607
      %v342 = vor.u32 %v341, 8388608
      %v343 = vsub.s32 0, %v342
      %v344 = vadd.s32 %v339, 1
      %vm345 = vcmp.gt.s32.totalorder %v344, 0
      %v346 = vsel %vm345, %v344, 0
      %v347 = vshrl.u32 %v346, 5
      %v348 = vand.u32 %v346, 31
      %v349 = vsub.s32 32, %v348
      %v350 = vshrl.u32 683565275, %v349
      %v351 = vshll.u32 683565275, %v348
      %v352 = vshrl.u32 2475754826, %v349
      %v353 = vor.u32 %v351, %v352
      %v354 = vshll.u32 2475754826, %v348
      %v355 = vshrl.u32 2131351028, %v349
      %v356 = vor.u32 %v354, %v355
      %v357 = vshll.u32 2131351028, %v348
      %v358 = vshrl.u32 2102212464, %v349
      %v359 = vor.u32 %v357, %v358
      %v360 = vshll.u32 2102212464, %v348
      %v361 = vshrl.u32 920167782, %v349
      %v362 = vor.u32 %v360, %v361
      %v363 = vshll.u32 920167782, %v348
      %v364 = vshrl.u32 1326507024, %v349
      %v365 = vor.u32 %v363, %v364
      %vm366 = vcmp.lt.s32.totalorder %v347, 1
      %vm367 = vcmp.lt.s32.totalorder %v347, 2
      %vm368 = vcmp.lt.s32.totalorder %v347, 3
      %vm369 = vcmp.lt.s32.totalorder %v347, 4
      %v370 = vsel %vm366, %v350, %v353
      %v371 = vsel %vm369, %v359, 2102212464
      %v372 = vsel %vm368, %v356, %v371
      %v373 = vsel %vm367, %v370, %v372
      %v374 = vsel %vm366, %v353, %v356
      %v375 = vsel %vm369, %v362, 920167782
      %v376 = vsel %vm368, %v359, %v375
      %v377 = vsel %vm367, %v374, %v376
      %v378 = vsel %vm366, %v356, %v359
      %v379 = vsel %vm369, %v365, 1326507024
      %v380 = vsel %vm368, %v362, %v379
      %v381 = vsel %vm367, %v378, %v380
      %v382 = vshll.u32 %v342, 8
      %v383 = vand.u32 %v382, 65535
      %v384 = vshrl.u32 %v382, 16
      %v385 = vand.u32 %v381, 65535
      %v386 = vshrl.u32 %v381, 16
      %v387 = vmul.u32 %v383, %v385
      %v388 = vmul.u32 %v383, %v386
      %v389 = vmul.u32 %v384, %v385
      %v390 = vmul.u32 %v384, %v386
      %v391 = vshll.u32 %v388, 16
      %v392 = vshrl.u32 %v388, 16
      %v393 = vshll.u32 %v389, 16
      %v394 = vshrl.u32 %v389, 16
      %vm395 = vc.u32 %v387, %v391
      %v396 = vsel %vm395, 1, 0
      %v397 = vadd.s32 %v387, %v391
      %v398 = vadd.s32 %v390, %v396
      %vm399 = vc.u32 %v397, %v393
      %v400 = vsel %vm399, 1, 0
      %v401 = vadd.s32 %v397, %v393
      %v402 = vadd.s32 %v398, %v400
      %v403 = vadd.s32 %v402, %v392
      %v404 = vadd.s32 %v403, %v394
      %v405 = vand.u32 %v382, 65535
      %v406 = vshrl.u32 %v382, 16
      %v407 = vand.u32 %v377, 65535
      %v408 = vshrl.u32 %v377, 16
      %v409 = vmul.u32 %v405, %v407
      %v410 = vmul.u32 %v405, %v408
      %v411 = vmul.u32 %v406, %v407
      %v412 = vmul.u32 %v406, %v408
      %v413 = vshll.u32 %v410, 16
      %v414 = vshrl.u32 %v410, 16
      %v415 = vshll.u32 %v411, 16
      %v416 = vshrl.u32 %v411, 16
      %vm417 = vc.u32 %v409, %v413
      %v418 = vsel %vm417, 1, 0
      %v419 = vadd.s32 %v409, %v413
      %v420 = vadd.s32 %v412, %v418
      %vm421 = vc.u32 %v419, %v415
      %v422 = vsel %vm421, 1, 0
      %v423 = vadd.s32 %v419, %v415
      %v424 = vadd.s32 %v420, %v422
      %v425 = vadd.s32 %v424, %v414
      %v426 = vadd.s32 %v425, %v416
      %v427 = vmul.u32 %v382, %v373
      %v428 = vadd.s32 %v404, %v423
      %vm429 = vc.u32 %v404, %v423
      %v430 = vadd.s32 %v426, 1
      %v431 = vsel %vm429, %v430, %v426
      %v432 = vadd.s32 %v427, %v431
      %v433 = vadd.s32 %v432, 536870912
      %v434 = vshrl.u32 %v433, 30
      %v435 = vshll.u32 %v434, 30
      %v436 = vsub.s32 %v432, %v435
      %vm437 = vcmp.lt.s32.totalorder %v436, 0
      %v438 = vsub.s32 0, %v436
      %v439 = vsel %vm437, %v438, %v436
      %v440 = vclz %v439
      %v441 = vsub.s32 %v440, 2
      %vm442 = vcmp.gt.s32.totalorder 0, %v441
      %v443 = vsel %vm442, 0, %v441
      %v444 = vsub.s32 32, %v443
      %v445 = vshll.u32 %v436, %v443
      %v446 = vshrl.u32 %v428, %v444
      %v447 = vor.u32 %v445, %v446
      %v448 = vsub.s32 4294967266, %v443
      %v449 = vadd.s32 %v448, 127
      %v450 = vshll.u32 %v449, 23
      %v451 = vor.u32 4788187, %v450
      %v452 = vand.u32 2147483647, %v451
      %v454 = vcvt.s32.f32 %v447
      %v455 = vmul.f32 %v454, %v452
      %v456 = vxor.u32 %v455, 2147483648
      %v457 = vsel %vm336, %v456, %v455
      %v458 = vsub.s32 4, %v434
      %v459 = vsel %vm336, %v458, %v434
      %v460 = vsel %vm335, %v328, %v457
      %v461 = vsel %vm335, 0, %v459
      %v462 = vmul.f32 %v460, %v460
      %v463 = vmul.f32 %v462, -0.001358992
      %v464 = vadd.f32 %v463, 0.041655596
      %v465 = vmul.f32 %v462, %v464
      %v466 = vadd.f32 %v465, -0.4999988
      %v467 = vmul.f32 %v462, %v466
      %v468 = vadd.f32 1.0, %v467
      %v469 = vmul.f32 %v460, %v460
      %v470 = vmul.f32 %v469, -0.00019511016
      %v471 = vadd.f32 %v470, 0.008332121
      %v472 = vmul.f32 %v469, %v471
      %v473 = vadd.f32 %v472, -0.16666654
      %v474 = vmul.f32 %v469, %v473
      %v475 = vadd.f32 %v474, 1.0
      %v476 = vmul.f32 %v475, %v460
      %vm477 = vweird.f32 %v328
      %v478 = vadd.s32 %v461, 3
      %v479 = vand.u32 %v478, 3
      %vm480 = vcmp.lt.s32.totalorder %v479, 2
      %vm481 = vcmp.eq.s32.totalorder %v479, 0
      %v482 = vxor.u32 %v476, 2147483648
      %v483 = vsel %vm481, %v468, %v482
      %vm484 = vcmp.eq.s32.totalorder %v479, 2
      %v485 = vxor.u32 %v468, 2147483648
      %v486 = vsel %vm484, %v485, %v476
      %v487 = vsel %vm480, %v483, %v486
      %v488 = vsel %vm477, nan, %v487
      %v489 = vand.u32 2147483647, %v329
      %vm490 = vcmp.le.f32.partialorder %v489, 0.7853982
      %vm491 = vcmp.lt.s32.totalorder %v329, 0
      %v492 = vand.u32 %v329, 2139095040
      %v493 = vshrl.u32 %v492, 23
      %v494 = vsub.s32 %v493, 127
      %v495 = vand.u32 2147483647, %v329
      %v496 = vand.u32 %v495, 8388607
      %v497 = vor.u32 %v496, 8388608
      %v498 = vsub.s32 0, %v497
      %v499 = vadd.s32 %v494, 1
      %vm500 = vcmp.gt.s32.totalorder %v499, 0
      %v501 = vsel %vm500, %v499, 0
      %v502 = vshrl.u32 %v501, 5
      %v503 = vand.u32 %v501, 31
      %v504 = vsub.s32 32, %v503
      %v505 = vshrl.u32 683565275, %v504
      %v506 = vshll.u32 683565275, %v503
      %v507 = vshrl.u32 2475754826, %v504
      %v508 = vor.u32 %v506, %v507
      %v509 = vshll.u32 2475754826, %v503
      %v510 = vshrl.u32 2131351028, %v504
      %v511 = vor.u32 %v509, %v510
      %v512 = vshll.u32 2131351028, %v503
      %v513 = vshrl.u32 2102212464, %v504
      %v514 = vor.u32 %v512, %v513
      %v515 = vshll.u32 2102212464, %v503
      %v516 = vshrl.u32 920167782, %v504
      %v517 = vor.u32 %v515, %v516
      %v518 = vshll.u32 920167782, %v503
      %v519 = vshrl.u32 1326507024, %v504
      %v520 = vor.u32 %v518, %v519
      %vm521 = vcmp.lt.s32.totalorder %v502, 1
      %vm522 = vcmp.lt.s32.totalorder %v502, 2
      %vm523 = vcmp.lt.s32.totalorder %v502, 3
      %vm524 = vcmp.lt.s32.totalorder %v502, 4
      %v525 = vsel %vm521, %v505, %v508
      %v526 = vsel %vm524, %v514, 2102212464
      %v527 = vsel %vm523, %v511, %v526
      %v528 = vsel %vm522, %v525, %v527
      %v529 = vsel %vm521, %v508, %v511
      %v530 = vsel %vm524, %v517, 920167782
      %v531 = vsel %vm523, %v514, %v530
      %v532 = vsel %vm522, %v529, %v531
      %v533 = vsel %vm521, %v511, %v514
      %v534 = vsel %vm524, %v520, 1326507024
      %v535 = vsel %vm523, %v517, %v534
      %v536 = vsel %vm522, %v533, %v535
      %v537 = vshll.u32 %v497, 8
      %v538 = vand.u32 %v537, 65535
      %v539 = vshrl.u32 %v537, 16
      %v540 = vand.u32 %v536, 65535
      %v541 = vshrl.u32 %v536, 16
      %v542 = vmul.u32 %v538, %v540
      %v543 = vmul.u32 %v538, %v541
      %v544 = vmul.u32 %v539, %v540
      %v545 = vmul.u32 %v539, %v541
      %v546 = vshll.u32 %v543, 16
      %v547 = vshrl.u32 %v543, 16
      %v548 = vshll.u32 %v544, 16
      %v549 = vshrl.u32 %v544, 16
      %vm550 = vc.u32 %v542, %v546
      %v551 = vsel %vm550, 1, 0
      %v552 = vadd.s32 %v542, %v546
      %v553 = vadd.s32 %v545, %v551
      %vm554 = vc.u32 %v552, %v548
      %v555 = vsel %vm554, 1, 0
      %v556 = vadd.s32 %v552, %v548
      %v557 = vadd.s32 %v553, %v555
      %v558 = vadd.s32 %v557, %v547
      %v559 = vadd.s32 %v558, %v549
      %v560 = vand.u32 %v537, 65535
      %v561 = vshrl.u32 %v537, 16
      %v562 = vand.u32 %v532, 65535
      %v563 = vshrl.u32 %v532, 16
      %v564 = vmul.u32 %v560, %v562
      %v565 = vmul.u32 %v560, %v563
      %v566 = vmul.u32 %v561, %v562
      %v567 = vmul.u32 %v561, %v563
      %v568 = vshll.u32 %v565, 16
      %v569 = vshrl.u32 %v565, 16
      %v570 = vshll.u32 %v566, 16
      %v571 = vshrl.u32 %v566, 16
      %vm572 = vc.u32 %v564, %v568
      %v573 = vsel %vm572, 1, 0
      %v574 = vadd.s32 %v564, %v568
      %v575 = vadd.s32 %v567, %v573
      %vm576 = vc.u32 %v574, %v570
      %v577 = vsel %vm576, 1, 0
      %v578 = vadd.s32 %v574, %v570
      %v579 = vadd.s32 %v575, %v577
      %v580 = vadd.s32 %v579, %v569
      %v581 = vadd.s32 %v580, %v571
      %v582 = vmul.u32 %v537, %v528
      %v583 = vadd.s32 %v559, %v578
      %vm584 = vc.u32 %v559, %v578
      %v585 = vadd.s32 %v581, 1
      %v586 = vsel %vm584, %v585, %v581
      %v587 = vadd.s32 %v582, %v586
      %v588 = vadd.s32 %v587, 536870912
      %v589 = vshrl.u32 %v588, 30
      %v590 = vshll.u32 %v589, 30
      %v591 = vsub.s32 %v587, %v590
      %vm592 = vcmp.lt.s32.totalorder %v591, 0
      %v593 = vsub.s32 0, %v591
      %v594 = vsel %vm592, %v593, %v591
      %v595 = vclz %v594
      %v596 = vsub.s32 %v595, 2
      %vm597 = vcmp.gt.s32.totalorder 0, %v596
      %v598 = vsel %vm597, 0, %v596
      %v599 = vsub.s32 32, %v598
      %v600 = vshll.u32 %v591, %v598
      %v601 = vshrl.u32 %v583, %v599
      %v602 = vor.u32 %v600, %v601
      %v603 = vsub.s32 4294967266, %v598
      %v604 = vadd.s32 %v603, 127
      %v605 = vshll.u32 %v604, 23
      %v606 = vor.u32 4788187, %v605
      %v607 = vand.u32 2147483647, %v606
      %v609 = vcvt.s32.f32 %v602
      %v610 = vmul.f32 %v609, %v607
      %v611 = vxor.u32 %v610, 2147483648
      %v612 = vsel %vm491, %v611, %v610
      %v613 = vsub.s32 4, %v589
      %v614 = vsel %vm491, %v613, %v589
      %v615 = vsel %vm490, %v329, %v612
      %v616 = vsel %vm490, 0, %v614
      %v617 = vmul.f32 %v615, %v615
      %v618 = vmul.f32 %v617, -0.001358992
      %v619 = vadd.f32 %v618, 0.041655596
      %v620 = vmul.f32 %v617, %v619
      %v621 = vadd.f32 %v620, -0.4999988
      %v622 = vmul.f32 %v617, %v621
      %v623 = vadd.f32 1.0, %v622
      %v624 = vmul.f32 %v615, %v615
      %v625 = vmul.f32 %v624, -0.00019511016
      %v626 = vadd.f32 %v625, 0.008332121
      %v627 = vmul.f32 %v624, %v626
      %v628 = vadd.f32 %v627, -0.16666654
      %v629 = vmul.f32 %v624, %v628
      %v630 = vadd.f32 %v629, 1.0
      %v631 = vmul.f32 %v630, %v615
      %vm632 = vweird.f32 %v329
      %v633 = vadd.s32 %v616, 3
      %v634 = vand.u32 %v633, 3
      %vm635 = vcmp.lt.s32.totalorder %v634, 2
      %vm636 = vcmp.eq.s32.totalorder %v634, 0
      %v637 = vxor.u32 %v631, 2147483648
      %v638 = vsel %vm636, %v623, %v637
      %vm639 = vcmp.eq.s32.totalorder %v634, 2
      %v640 = vxor.u32 %v623, 2147483648
      %v641 = vsel %vm639, %v640, %v631
      %v642 = vsel %vm635, %v638, %v641
      %v643 = vsel %vm632, nan, %v642
      %v644 = vand.u32 2147483647, %v330
      %vm645 = vcmp.le.f32.partialorder %v644, 0.7853982
      %vm646 = vcmp.lt.s32.totalorder %v330, 0
      %v647 = vand.u32 %v330, 2139095040
      %v648 = vshrl.u32 %v647, 23
      %v649 = vsub.s32 %v648, 127
      %v650 = vand.u32 2147483647, %v330
      %v651 = vand.u32 %v650, 8388607
      %v652 = vor.u32 %v651, 8388608
      %v653 = vsub.s32 0, %v652
      %v654 = vadd.s32 %v649, 1
      %vm655 = vcmp.gt.s32.totalorder %v654, 0
      %v656 = vsel %vm655, %v654, 0
      %v657 = vshrl.u32 %v656, 5
      %v658 = vand.u32 %v656, 31
      %v659 = vsub.s32 32, %v658
      %v660 = vshrl.u32 683565275, %v659
      %v661 = vshll.u32 683565275, %v658
      %v662 = vshrl.u32 2475754826, %v659
      %v663 = vor.u32 %v661, %v662
      %v664 = vshll.u32 2475754826, %v658
      %v665 = vshrl.u32 2131351028, %v659
      %v666 = vor.u32 %v664, %v665
      %v667 = vshll.u32 2131351028, %v658
      %v668 = vshrl.u32 2102212464, %v659
      %v669 = vor.u32 %v667, %v668
      %v670 = vshll.u32 2102212464, %v658
      %v671 = vshrl.u32 920167782, %v659
      %v672 = vor.u32 %v670, %v671
      %v673 = vshll.u32 920167782, %v658
      %v674 = vshrl.u32 1326507024, %v659
      %v675 = vor.u32 %v673, %v674
      %vm676 = vcmp.lt.s32.totalorder %v657, 1
      %vm677 = vcmp.lt.s32.totalorder %v657, 2
      %vm678 = vcmp.lt.s32.totalorder %v657, 3
      %vm679 = vcmp.lt.s32.totalorder %v657, 4
      %v680 = vsel %vm676, %v660, %v663
      %v681 = vsel %vm679, %v669, 2102212464
      %v682 = vsel %vm678, %v666, %v681
      %v683 = vsel %vm677, %v680, %v682
      %v684 = vsel %vm676, %v663, %v666
      %v685 = vsel %vm679, %v672, 920167782
      %v686 = vsel %vm678, %v669, %v685
      %v687 = vsel %vm677, %v684, %v686
      %v688 = vsel %vm676, %v666, %v669
      %v689 = vsel %vm679, %v675, 1326507024
      %v690 = vsel %vm678, %v672, %v689
      %v691 = vsel %vm677, %v688, %v690
      %v692 = vshll.u32 %v652, 8
      %v693 = vand.u32 %v692, 65535
      %v694 = vshrl.u32 %v692, 16
      %v695 = vand.u32 %v691, 65535
      %v696 = vshrl.u32 %v691, 16
      %v697 = vmul.u32 %v693, %v695
      %v698 = vmul.u32 %v693, %v696
      %v699 = vmul.u32 %v694, %v695
      %v700 = vmul.u32 %v694, %v696
      %v701 = vshll.u32 %v698, 16
      %v702 = vshrl.u32 %v698, 16
      %v703 = vshll.u32 %v699, 16
      %v704 = vshrl.u32 %v699, 16
      %vm705 = vc.u32 %v697, %v701
      %v706 = vsel %vm705, 1, 0
      %v707 = vadd.s32 %v697, %v701
      %v708 = vadd.s32 %v700, %v706
      %vm709 = vc.u32 %v707, %v703
      %v710 = vsel %vm709, 1, 0
      %v711 = vadd.s32 %v707, %v703
      %v712 = vadd.s32 %v708, %v710
      %v713 = vadd.s32 %v712, %v702
      %v714 = vadd.s32 %v713, %v704
      %v715 = vand.u32 %v692, 65535
      %v716 = vshrl.u32 %v692, 16
      %v717 = vand.u32 %v687, 65535
      %v718 = vshrl.u32 %v687, 16
      %v719 = vmul.u32 %v715, %v717
      %v720 = vmul.u32 %v715, %v718
      %v721 = vmul.u32 %v716, %v717
      %v722 = vmul.u32 %v716, %v718
      %v723 = vshll.u32 %v720, 16
      %v724 = vshrl.u32 %v720, 16
      %v725 = vshll.u32 %v721, 16
      %v726 = vshrl.u32 %v721, 16
      %vm727 = vc.u32 %v719, %v723
      %v728 = vsel %vm727, 1, 0
      %v729 = vadd.s32 %v719, %v723
      %v730 = vadd.s32 %v722, %v728
      %vm731 = vc.u32 %v729, %v725
      %v732 = vsel %vm731, 1, 0
      %v733 = vadd.s32 %v729, %v725
      %v734 = vadd.s32 %v730, %v732
      %v735 = vadd.s32 %v734, %v724
      %v736 = vadd.s32 %v735, %v726
      %v737 = vmul.u32 %v692, %v683
      %v738 = vadd.s32 %v714, %v733
      %vm739 = vc.u32 %v714, %v733
      %v740 = vadd.s32 %v736, 1
      %v741 = vsel %vm739, %v740, %v736
      %v742 = vadd.s32 %v737, %v741
      %v743 = vadd.s32 %v742, 536870912
      %v744 = vshrl.u32 %v743, 30
      %v745 = vshll.u32 %v744, 30
      %v746 = vsub.s32 %v742, %v745
      %vm747 = vcmp.lt.s32.totalorder %v746, 0
      %v748 = vsub.s32 0, %v746
      %v749 = vsel %vm747, %v748, %v746
      %v750 = vclz %v749
      %v751 = vsub.s32 %v750, 2
      %vm752 = vcmp.gt.s32.totalorder 0, %v751
      %v753 = vsel %vm752, 0, %v751
      %v754 = vsub.s32 32, %v753
      %v755 = vshll.u32 %v746, %v753
      %v756 = vshrl.u32 %v738, %v754
      %v757 = vor.u32 %v755, %v756
      %v758 = vsub.s32 4294967266, %v753
      %v759 = vadd.s32 %v758, 127
      %v760 = vshll.u32 %v759, 23
      %v761 = vor.u32 4788187, %v760
      %v762 = vand.u32 2147483647, %v761
      %v764 = vcvt.s32.f32 %v757
      %v765 = vmul.f32 %v764, %v762
      %v766 = vxor.u32 %v765, 2147483648
      %v767 = vsel %vm646, %v766, %v765
      %v768 = vsub.s32 4, %v744
      %v769 = vsel %vm646, %v768, %v744
      %v770 = vsel %vm645, %v330, %v767
      %v771 = vsel %vm645, 0, %v769
      %v772 = vmul.f32 %v770, %v770
      %v773 = vmul.f32 %v772, -0.001358992
      %v774 = vadd.f32 %v773, 0.041655596
      %v775 = vmul.f32 %v772, %v774
      %v776 = vadd.f32 %v775, -0.4999988
      %v777 = vmul.f32 %v772, %v776
      %v778 = vadd.f32 1.0, %v777
      %v779 = vmul.f32 %v770, %v770
      %v780 = vmul.f32 %v779, -0.00019511016
      %v781 = vadd.f32 %v780, 0.008332121
      %v782 = vmul.f32 %v779, %v781
      %v783 = vadd.f32 %v782, -0.16666654
      %v784 = vmul.f32 %v779, %v783
      %v785 = vadd.f32 %v784, 1.0
      %v786 = vmul.f32 %v785, %v770
      %vm787 = vweird.f32 %v330
      %v788 = vadd.s32 %v771, 3
      %v789 = vand.u32 %v788, 3
      %vm790 = vcmp.lt.s32.totalorder %v789, 2
      %vm791 = vcmp.eq.s32.totalorder %v789, 0
      %v792 = vxor.u32 %v786, 2147483648
      %v793 = vsel %vm791, %v778, %v792
      %vm794 = vcmp.eq.s32.totalorder %v789, 2
      %v795 = vxor.u32 %v778, 2147483648
      %v796 = vsel %vm794, %v795, %v786
      %v797 = vsel %vm790, %v793, %v796
      %v798 = vsel %vm787, nan, %v797
      %v799 = vand.u32 2147483647, %v331
      %vm800 = vcmp.le.f32.partialorder %v799, 0.7853982
      %vm801 = vcmp.lt.s32.totalorder %v331, 0
      %v802 = vand.u32 %v331, 2139095040
      %v803 = vshrl.u32 %v802, 23
      %v804 = vsub.s32 %v803, 127
      %v805 = vand.u32 2147483647, %v331
      %v806 = vand.u32 %v805, 8388607
      %v807 = vor.u32 %v806, 8388608
      %v808 = vsub.s32 0, %v807
      %v809 = vadd.s32 %v804, 1
      %vm810 = vcmp.gt.s32.totalorder %v809, 0
      %v811 = vsel %vm810, %v809, 0
      %v812 = vshrl.u32 %v811, 5
      %v813 = vand.u32 %v811, 31
      %v814 = vsub.s32 32, %v813
      %v815 = vshrl.u32 683565275, %v814
      %v816 = vshll.u32 683565275, %v813
      %v817 = vshrl.u32 2475754826, %v814
      %v818 = vor.u32 %v816, %v817
      %v819 = vshll.u32 2475754826, %v813
      %v820 = vshrl.u32 2131351028, %v814
      %v821 = vor.u32 %v819, %v820
      %v822 = vshll.u32 2131351028, %v813
      %v823 = vshrl.u32 2102212464, %v814
      %v824 = vor.u32 %v822, %v823
      %v825 = vshll.u32 2102212464, %v813
      %v826 = vshrl.u32 920167782, %v814
      %v827 = vor.u32 %v825, %v826
      %v828 = vshll.u32 920167782, %v813
      %v829 = vshrl.u32 1326507024, %v814
      %v830 = vor.u32 %v828, %v829
      %vm831 = vcmp.lt.s32.totalorder %v812, 1
      %vm832 = vcmp.lt.s32.totalorder %v812, 2
      %vm833 = vcmp.lt.s32.totalorder %v812, 3
      %vm834 = vcmp.lt.s32.totalorder %v812, 4
      %v835 = vsel %vm831, %v815, %v818
      %v836 = vsel %vm834, %v824, 2102212464
      %v837 = vsel %vm833, %v821, %v836
      %v838 = vsel %vm832, %v835, %v837
      %v839 = vsel %vm831, %v818, %v821
      %v840 = vsel %vm834, %v827, 920167782
      %v841 = vsel %vm833, %v824, %v840
      %v842 = vsel %vm832, %v839, %v841
      %v843 = vsel %vm831, %v821, %v824
      %v844 = vsel %vm834, %v830, 1326507024
      %v845 = vsel %vm833, %v827, %v844
      %v846 = vsel %vm832, %v843, %v845
      %v847 = vshll.u32 %v807, 8
      %v848 = vand.u32 %v847, 65535
      %v849 = vshrl.u32 %v847, 16
      %v850 = vand.u32 %v846, 65535
      %v851 = vshrl.u32 %v846, 16
      %v852 = vmul.u32 %v848, %v850
      %v853 = vmul.u32 %v848, %v851
      %v854 = vmul.u32 %v849, %v850
      %v855 = vmul.u32 %v849, %v851
      %v856 = vshll.u32 %v853, 16
      %v857 = vshrl.u32 %v853, 16
      %v858 = vshll.u32 %v854, 16
      %v859 = vshrl.u32 %v854, 16
      %vm860 = vc.u32 %v852, %v856
      %v861 = vsel %vm860, 1, 0
      %v862 = vadd.s32 %v852, %v856
      %v863 = vadd.s32 %v855, %v861
      %vm864 = vc.u32 %v862, %v858
      %v865 = vsel %vm864, 1, 0
      %v866 = vadd.s32 %v862, %v858
      %v867 = vadd.s32 %v863, %v865
      %v868 = vadd.s32 %v867, %v857
      %v869 = vadd.s32 %v868, %v859
      %v870 = vand.u32 %v847, 65535
      %v871 = vshrl.u32 %v847, 16
      %v872 = vand.u32 %v842, 65535
      %v873 = vshrl.u32 %v842, 16
      %v874 = vmul.u32 %v870, %v872
      %v875 = vmul.u32 %v870, %v873
      %v876 = vmul.u32 %v871, %v872
      %v877 = vmul.u32 %v871, %v873
      %v878 = vshll.u32 %v875, 16
      %v879 = vshrl.u32 %v875, 16
      %v880 = vshll.u32 %v876, 16
      %v881 = vshrl.u32 %v876, 16
      %vm882 = vc.u32 %v874, %v878
      %v883 = vsel %vm882, 1, 0
      %v884 = vadd.s32 %v874, %v878
      %v885 = vadd.s32 %v877, %v883
      %vm886 = vc.u32 %v884, %v880
      %v887 = vsel %vm886, 1, 0
      %v888 = vadd.s32 %v884, %v880
      %v889 = vadd.s32 %v885, %v887
      %v890 = vadd.s32 %v889, %v879
      %v891 = vadd.s32 %v890, %v881
      %v892 = vmul.u32 %v847, %v838
      %v893 = vadd.s32 %v869, %v888
      %vm894 = vc.u32 %v869, %v888
      %v895 = vadd.s32 %v891, 1
      %v896 = vsel %vm894, %v895, %v891
      %v897 = vadd.s32 %v892, %v896
      %v898 = vadd.s32 %v897, 536870912
      %v899 = vshrl.u32 %v898, 30
      %v900 = vshll.u32 %v899, 30
      %v901 = vsub.s32 %v897, %v900
      %vm902 = vcmp.lt.s32.totalorder %v901, 0
      %v903 = vsub.s32 0, %v901
      %v904 = vsel %vm902, %v903, %v901
      %v905 = vclz %v904
      %v906 = vsub.s32 %v905, 2
      %vm907 = vcmp.gt.s32.totalorder 0, %v906
      %v908 = vsel %vm907, 0, %v906
      %v909 = vsub.s32 32, %v908
      %v910 = vshll.u32 %v901, %v908
      %v911 = vshrl.u32 %v893, %v909
      %v912 = vor.u32 %v910, %v911
      %v913 = vsub.s32 4294967266, %v908
      %v914 = vadd.s32 %v913, 127
      %v915 = vshll.u32 %v914, 23
      %v916 = vor.u32 4788187, %v915
      %v917 = vand.u32 2147483647, %v916
      %v919 = vcvt.s32.f32 %v912
      %v920 = vmul.f32 %v919, %v917
      %v921 = vxor.u32 %v920, 2147483648
      %v922 = vsel %vm801, %v921, %v920
      %v923 = vsub.s32 4, %v899
      %v924 = vsel %vm801, %v923, %v899
      %v925 = vsel %vm800, %v331, %v922
      %v926 = vsel %vm800, 0, %v924
      %v927 = vmul.f32 %v925, %v925
      %v928 = vmul.f32 %v927, -0.001358992
      %v929 = vadd.f32 %v928, 0.041655596
      %v930 = vmul.f32 %v927, %v929
      %v931 = vadd.f32 %v930, -0.4999988
      %v932 = vmul.f32 %v927, %v931
      %v933 = vadd.f32 1.0, %v932
      %v934 = vmul.f32 %v925, %v925
      %v935 = vmul.f32 %v934, -0.00019511016
      %v936 = vadd.f32 %v935, 0.008332121
      %v937 = vmul.f32 %v934, %v936
      %v938 = vadd.f32 %v937, -0.16666654
      %v939 = vmul.f32 %v934, %v938
      %v940 = vadd.f32 %v939, 1.0
      %v941 = vmul.f32 %v940, %v925
      %vm942 = vweird.f32 %v331
      %v943 = vadd.s32 %v926, 3
      %v944 = vand.u32 %v943, 3
      %vm945 = vcmp.lt.s32.totalorder %v944, 2
      %vm946 = vcmp.eq.s32.totalorder %v944, 0
      %v947 = vxor.u32 %v941, 2147483648
      %v948 = vsel %vm946, %v933, %v947
      %vm949 = vcmp.eq.s32.totalorder %v944, 2
      %v950 = vxor.u32 %v933, 2147483648
      %v951 = vsel %vm949, %v950, %v941
      %v952 = vsel %vm945, %v948, %v951
      %v953 = vsel %vm942, nan, %v952
      %v954 = vand.u32 2147483647, %v332
      %vm955 = vcmp.le.f32.partialorder %v954, 0.7853982
      %vm956 = vcmp.lt.s32.totalorder %v332, 0
      %v957 = vand.u32 %v332, 2139095040
      %v958 = vshrl.u32 %v957, 23
      %v959 = vsub.s32 %v958, 127
      %v960 = vand.u32 2147483647, %v332
      %v961 = vand.u32 %v960, 8388607
      %v962 = vor.u32 %v961, 8388608
      %v963 = vsub.s32 0, %v962
      %v964 = vadd.s32 %v959, 1
      %vm965 = vcmp.gt.s32.totalorder %v964, 0
      %v966 = vsel %vm965, %v964, 0
      %v967 = vshrl.u32 %v966, 5
      %v968 = vand.u32 %v966, 31
      %v969 = vsub.s32 32, %v968
      %v970 = vshrl.u32 683565275, %v969
      %v971 = vshll.u32 683565275, %v968
      %v972 = vshrl.u32 2475754826, %v969
      %v973 = vor.u32 %v971, %v972
      %v974 = vshll.u32 2475754826, %v968
      %v975 = vshrl.u32 2131351028, %v969
      %v976 = vor.u32 %v974, %v975
      %v977 = vshll.u32 2131351028, %v968
      %v978 = vshrl.u32 2102212464, %v969
      %v979 = vor.u32 %v977, %v978
      %v980 = vshll.u32 2102212464, %v968
      %v981 = vshrl.u32 920167782, %v969
      %v982 = vor.u32 %v980, %v981
      %v983 = vshll.u32 920167782, %v968
      %v984 = vshrl.u32 1326507024, %v969
      %v985 = vor.u32 %v983, %v984
      %vm986 = vcmp.lt.s32.totalorder %v967, 1
      %vm987 = vcmp.lt.s32.totalorder %v967, 2
      %vm988 = vcmp.lt.s32.totalorder %v967, 3
      %vm989 = vcmp.lt.s32.totalorder %v967, 4
      %v990 = vsel %vm986, %v970, %v973
      %v991 = vsel %vm989, %v979, 2102212464
      %v992 = vsel %vm988, %v976, %v991
      %v993 = vsel %vm987, %v990, %v992
      %v994 = vsel %vm986, %v973, %v976
      %v995 = vsel %vm989, %v982, 920167782
      %v996 = vsel %vm988, %v979, %v995
      %v997 = vsel %vm987, %v994, %v996
      %v998 = vsel %vm986, %v976, %v979
      %v999 = vsel %vm989, %v985, 1326507024
      %v1000 = vsel %vm988, %v982, %v999
      %v1001 = vsel %vm987, %v998, %v1000
      %v1002 = vshll.u32 %v962, 8
      %v1003 = vand.u32 %v1002, 65535
      %v1004 = vshrl.u32 %v1002, 16
      %v1005 = vand.u32 %v1001, 65535
      %v1006 = vshrl.u32 %v1001, 16
      %v1007 = vmul.u32 %v1003, %v1005
      %v1008 = vmul.u32 %v1003, %v1006
      %v1009 = vmul.u32 %v1004, %v1005
      %v1010 = vmul.u32 %v1004, %v1006
      %v1011 = vshll.u32 %v1008, 16
      %v1012 = vshrl.u32 %v1008, 16
      %v1013 = vshll.u32 %v1009, 16
      %v1014 = vshrl.u32 %v1009, 16
      %vm1015 = vc.u32 %v1007, %v1011
      %v1016 = vsel %vm1015, 1, 0
      %v1017 = vadd.s32 %v1007, %v1011
      %v1018 = vadd.s32 %v1010, %v1016
      %vm1019 = vc.u32 %v1017, %v1013
      %v1020 = vsel %vm1019, 1, 0
      %v1021 = vadd.s32 %v1017, %v1013
      %v1022 = vadd.s32 %v1018, %v1020
      %v1023 = vadd.s32 %v1022, %v1012
      %v1024 = vadd.s32 %v1023, %v1014
      %v1025 = vand.u32 %v1002, 65535
      %v1026 = vshrl.u32 %v1002, 16
      %v1027 = vand.u32 %v997, 65535
      %v1028 = vshrl.u32 %v997, 16
      %v1029 = vmul.u32 %v1025, %v1027
      %v1030 = vmul.u32 %v1025, %v1028
      %v1031 = vmul.u32 %v1026, %v1027
      %v1032 = vmul.u32 %v1026, %v1028
      %v1033 = vshll.u32 %v1030, 16
      %v1034 = vshrl.u32 %v1030, 16
      %v1035 = vshll.u32 %v1031, 16
      %v1036 = vshrl.u32 %v1031, 16
      %vm1037 = vc.u32 %v1029, %v1033
      %v1038 = vsel %vm1037, 1, 0
      %v1039 = vadd.s32 %v1029, %v1033
      %v1040 = vadd.s32 %v1032, %v1038
      %vm1041 = vc.u32 %v1039, %v1035
      %v1042 = vsel %vm1041, 1, 0
      %v1043 = vadd.s32 %v1039, %v1035
      %v1044 = vadd.s32 %v1040, %v1042
      %v1045 = vadd.s32 %v1044, %v1034
      %v1046 = vadd.s32 %v1045, %v1036
      %v1047 = vmul.u32 %v1002, %v993
      %v1048 = vadd.s32 %v1024, %v1043
      %vm1049 = vc.u32 %v1024, %v1043
      %v1050 = vadd.s32 %v1046, 1
      %v1051 = vsel %vm1049, %v1050, %v1046
      %v1052 = vadd.s32 %v1047, %v1051
      %v1053 = vadd.s32 %v1052, 536870912
      %v1054 = vshrl.u32 %v1053, 30
      %v1055 = vshll.u32 %v1054, 30
      %v1056 = vsub.s32 %v1052, %v1055
      %vm1057 = vcmp.lt.s32.totalorder %v1056, 0
      %v1058 = vsub.s32 0, %v1056
      %v1059 = vsel %vm1057, %v1058, %v1056
      %v1060 = vclz %v1059
      %v1061 = vsub.s32 %v1060, 2
      %vm1062 = vcmp.gt.s32.totalorder 0, %v1061
      %v1063 = vsel %vm1062, 0, %v1061
      %v1064 = vsub.s32 32, %v1063
      %v1065 = vshll.u32 %v1056, %v1063
      %v1066 = vshrl.u32 %v1048, %v1064
      %v1067 = vor.u32 %v1065, %v1066
      %v1068 = vsub.s32 4294967266, %v1063
      %v1069 = vadd.s32 %v1068, 127
      %v1070 = vshll.u32 %v1069, 23
      %v1071 = vor.u32 4788187, %v1070
      %v1072 = vand.u32 2147483647, %v1071
      %v1074 = vcvt.s32.f32 %v1067
      %v1075 = vmul.f32 %v1074, %v1072
      %v1076 = vxor.u32 %v1075, 2147483648
      %v1077 = vsel %vm956, %v1076, %v1075
      %v1078 = vsub.s32 4, %v1054
      %v1079 = vsel %vm956, %v1078, %v1054
      %v1080 = vsel %vm955, %v332, %v1077
      %v1081 = vsel %vm955, 0, %v1079
      %v1082 = vmul.f32 %v1080, %v1080
      %v1083 = vmul.f32 %v1082, -0.001358992
      %v1084 = vadd.f32 %v1083, 0.041655596
      %v1085 = vmul.f32 %v1082, %v1084
      %v1086 = vadd.f32 %v1085, -0.4999988
      %v1087 = vmul.f32 %v1082, %v1086
      %v1088 = vadd.f32 1.0, %v1087
      %v1089 = vmul.f32 %v1080, %v1080
      %v1090 = vmul.f32 %v1089, -0.00019511016
      %v1091 = vadd.f32 %v1090, 0.008332121
      %v1092 = vmul.f32 %v1089, %v1091
      %v1093 = vadd.f32 %v1092, -0.16666654
      %v1094 = vmul.f32 %v1089, %v1093
      %v1095 = vadd.f32 %v1094, 1.0
      %v1096 = vmul.f32 %v1095, %v1080
      %vm1097 = vweird.f32 %v332
      %v1098 = vadd.s32 %v1081, 3
      %v1099 = vand.u32 %v1098, 3
      %vm1100 = vcmp.lt.s32.totalorder %v1099, 2
      %vm1101 = vcmp.eq.s32.totalorder %v1099, 0
      %v1102 = vxor.u32 %v1096, 2147483648
      %v1103 = vsel %vm1101, %v1088, %v1102
      %vm1104 = vcmp.eq.s32.totalorder %v1099, 2
      %v1105 = vxor.u32 %v1088, 2147483648
      %v1106 = vsel %vm1104, %v1105, %v1096
      %v1107 = vsel %vm1100, %v1103, %v1106
      %v1108 = vsel %vm1097, nan, %v1107
      %v1109 = vand.u32 2147483647, %v333
      %vm1110 = vcmp.le.f32.partialorder %v1109, 0.7853982
      %vm1111 = vcmp.lt.s32.totalorder %v333, 0
      %v1112 = vand.u32 %v333, 2139095040
      %v1113 = vshrl.u32 %v1112, 23
      %v1114 = vsub.s32 %v1113, 127
      %v1115 = vand.u32 2147483647, %v333
      %v1116 = vand.u32 %v1115, 8388607
      %v1117 = vor.u32 %v1116, 8388608
      %v1118 = vsub.s32 0, %v1117
      %v1119 = vadd.s32 %v1114, 1
      %vm1120 = vcmp.gt.s32.totalorder %v1119, 0
      %v1121 = vsel %vm1120, %v1119, 0
      %v1122 = vshrl.u32 %v1121, 5
      %v1123 = vand.u32 %v1121, 31
      %v1124 = vsub.s32 32, %v1123
      %v1125 = vshrl.u32 683565275, %v1124
      %v1126 = vshll.u32 683565275, %v1123
      %v1127 = vshrl.u32 2475754826, %v1124
      %v1128 = vor.u32 %v1126, %v1127
      %v1129 = vshll.u32 2475754826, %v1123
      %v1130 = vshrl.u32 2131351028, %v1124
      %v1131 = vor.u32 %v1129, %v1130
      %v1132 = vshll.u32 2131351028, %v1123
      %v1133 = vshrl.u32 2102212464, %v1124
      %v1134 = vor.u32 %v1132, %v1133
      %v1135 = vshll.u32 2102212464, %v1123
      %v1136 = vshrl.u32 920167782, %v1124
      %v1137 = vor.u32 %v1135, %v1136
      %v1138 = vshll.u32 920167782, %v1123
      %v1139 = vshrl.u32 1326507024, %v1124
      %v1140 = vor.u32 %v1138, %v1139
      %vm1141 = vcmp.lt.s32.totalorder %v1122, 1
      %vm1142 = vcmp.lt.s32.totalorder %v1122, 2
      %vm1143 = vcmp.lt.s32.totalorder %v1122, 3
      %vm1144 = vcmp.lt.s32.totalorder %v1122, 4
      %v1145 = vsel %vm1141, %v1125, %v1128
      %v1146 = vsel %vm1144, %v1134, 2102212464
      %v1147 = vsel %vm1143, %v1131, %v1146
      %v1148 = vsel %vm1142, %v1145, %v1147
      %v1149 = vsel %vm1141, %v1128, %v1131
      %v1150 = vsel %vm1144, %v1137, 920167782
      %v1151 = vsel %vm1143, %v1134, %v1150
      %v1152 = vsel %vm1142, %v1149, %v1151
      %v1153 = vsel %vm1141, %v1131, %v1134
      %v1154 = vsel %vm1144, %v1140, 1326507024
      %v1155 = vsel %vm1143, %v1137, %v1154
      %v1156 = vsel %vm1142, %v1153, %v1155
      %v1157 = vshll.u32 %v1117, 8
      %v1158 = vand.u32 %v1157, 65535
      %v1159 = vshrl.u32 %v1157, 16
      %v1160 = vand.u32 %v1156, 65535
      %v1161 = vshrl.u32 %v1156, 16
      %v1162 = vmul.u32 %v1158, %v1160
      %v1163 = vmul.u32 %v1158, %v1161
      %v1164 = vmul.u32 %v1159, %v1160
      %v1165 = vmul.u32 %v1159, %v1161
      %v1166 = vshll.u32 %v1163, 16
      %v1167 = vshrl.u32 %v1163, 16
      %v1168 = vshll.u32 %v1164, 16
      %v1169 = vshrl.u32 %v1164, 16
      %vm1170 = vc.u32 %v1162, %v1166
      %v1171 = vsel %vm1170, 1, 0
      %v1172 = vadd.s32 %v1162, %v1166
      %v1173 = vadd.s32 %v1165, %v1171
      %vm1174 = vc.u32 %v1172, %v1168
      %v1175 = vsel %vm1174, 1, 0
      %v1176 = vadd.s32 %v1172, %v1168
      %v1177 = vadd.s32 %v1173, %v1175
      %v1178 = vadd.s32 %v1177, %v1167
      %v1179 = vadd.s32 %v1178, %v1169
      %v1180 = vand.u32 %v1157, 65535
      %v1181 = vshrl.u32 %v1157, 16
      %v1182 = vand.u32 %v1152, 65535
      %v1183 = vshrl.u32 %v1152, 16
      %v1184 = vmul.u32 %v1180, %v1182
      %v1185 = vmul.u32 %v1180, %v1183
      %v1186 = vmul.u32 %v1181, %v1182
      %v1187 = vmul.u32 %v1181, %v1183
      %v1188 = vshll.u32 %v1185, 16
      %v1189 = vshrl.u32 %v1185, 16
      %v1190 = vshll.u32 %v1186, 16
      %v1191 = vshrl.u32 %v1186, 16
      %vm1192 = vc.u32 %v1184, %v1188
      %v1193 = vsel %vm1192, 1, 0
      %v1194 = vadd.s32 %v1184, %v1188
      %v1195 = vadd.s32 %v1187, %v1193
      %vm1196 = vc.u32 %v1194, %v1190
      %v1197 = vsel %vm1196, 1, 0
      %v1198 = vadd.s32 %v1194, %v1190
      %v1199 = vadd.s32 %v1195, %v1197
      %v1200 = vadd.s32 %v1199, %v1189
      %v1201 = vadd.s32 %v1200, %v1191
      %v1202 = vmul.u32 %v1157, %v1148
      %v1203 = vadd.s32 %v1179, %v1198
      %vm1204 = vc.u32 %v1179, %v1198
      %v1205 = vadd.s32 %v1201, 1
      %v1206 = vsel %vm1204, %v1205, %v1201
      %v1207 = vadd.s32 %v1202, %v1206
      %v1208 = vadd.s32 %v1207, 536870912
      %v1209 = vshrl.u32 %v1208, 30
      %v1210 = vshll.u32 %v1209, 30
      %v1211 = vsub.s32 %v1207, %v1210
      %vm1212 = vcmp.lt.s32.totalorder %v1211, 0
      %v1213 = vsub.s32 0, %v1211
      %v1214 = vsel %vm1212, %v1213, %v1211
      %v1215 = vclz %v1214
      %v1216 = vsub.s32 %v1215, 2
      %vm1217 = vcmp.gt.s32.totalorder 0, %v1216
      %v1218 = vsel %vm1217, 0, %v1216
      %v1219 = vsub.s32 32, %v1218
      %v1220 = vshll.u32 %v1211, %v1218
      %v1221 = vshrl.u32 %v1203, %v1219
      %v1222 = vor.u32 %v1220, %v1221
      %v1223 = vsub.s32 4294967266, %v1218
      %v1224 = vadd.s32 %v1223, 127
      %v1225 = vshll.u32 %v1224, 23
      %v1226 = vor.u32 4788187, %v1225
      %v1227 = vand.u32 2147483647, %v1226
      %v1229 = vcvt.s32.f32 %v1222
      %v1230 = vmul.f32 %v1229, %v1227
      %v1231 = vxor.u32 %v1230, 2147483648
      %v1232 = vsel %vm1111, %v1231, %v1230
      %v1233 = vsub.s32 4, %v1209
      %v1234 = vsel %vm1111, %v1233, %v1209
      %v1235 = vsel %vm1110, %v333, %v1232
      %v1236 = vsel %vm1110, 0, %v1234
      %v1237 = vmul.f32 %v1235, %v1235
      %v1238 = vmul.f32 %v1237, -0.001358992
      %v1239 = vadd.f32 %v1238, 0.041655596
      %v1240 = vmul.f32 %v1237, %v1239
      %v1241 = vadd.f32 %v1240, -0.4999988
      %v1242 = vmul.f32 %v1237, %v1241
      %v1243 = vadd.f32 1.0, %v1242
      %v1244 = vmul.f32 %v1235, %v1235
      %v1245 = vmul.f32 %v1244, -0.00019511016
      %v1246 = vadd.f32 %v1245, 0.008332121
      %v1247 = vmul.f32 %v1244, %v1246
      %v1248 = vadd.f32 %v1247, -0.16666654
      %v1249 = vmul.f32 %v1244, %v1248
      %v1250 = vadd.f32 %v1249, 1.0
      %v1251 = vmul.f32 %v1250, %v1235
      %vm1252 = vweird.f32 %v333
      %v1253 = vadd.s32 %v1236, 3
      %v1254 = vand.u32 %v1253, 3
      %vm1255 = vcmp.lt.s32.totalorder %v1254, 2
      %vm1256 = vcmp.eq.s32.totalorder %v1254, 0
      %v1257 = vxor.u32 %v1251, 2147483648
      %v1258 = vsel %vm1256, %v1243, %v1257
      %vm1259 = vcmp.eq.s32.totalorder %v1254, 2
      %v1260 = vxor.u32 %v1243, 2147483648
      %v1261 = vsel %vm1259, %v1260, %v1251
      %v1262 = vsel %vm1255, %v1258, %v1261
      %v1263 = vsel %vm1252, nan, %v1262
      %1264 = vst [vmem:[%s208] sm:$0xff] %v488
      %1265 = vst [vmem:[%s208 + $0x8] sm:$0xff] %v643
      %1266 = vst [vmem:[%s208 + $0x10] sm:$0xff] %v798
      %1267 = vst [vmem:[%s208 + $0x18] sm:$0xff] %v953
      %1268 = vst [vmem:[%s208 + $0x20] sm:$0xf] %v1108
      %1269 = vst [vmem:[%s208 + $0x28] sm:$0xf] %v1263
      %s1270 = smul.u32 2, %s19
      %p1271 = scmp.lt.s32.totalorder %s18, 1
      %s1272 = scalar_select %p1271, %s18, 1
      %p1273 = scmp.lt.s32.totalorder %s1270, 1
      %s1274 = scalar_select %p1273, %s1270, 1
      %s1275 = smul.addr %s1272, 6
      %s1276 = sadd.s32 %s1274, %s1275
      %s1277 = smul.addr %s1276, 8
      %s1278 = scalar_lea.vmem %s3, %s1277
      // Predicated region
      $region33: #{tpu_custom_call.1} parent=31 // pred_check
        %p1279 = pneg %p116
      $region34: #{tpu_custom_call.1} parent=31 // pred_check_branch
        %1281 = sbr.rel (%p1279) target = $region36
      $region35: #{tpu_custom_call.1} parent=31 // pred_region
        %s1282 = smul.u32 2, %s19
      $region36: #{tpu_custom_call.1} parent=31 // pred_fallthru
        _
    $region32: #{tpu_custom_call.1} parent=5 // pred_fallthru
      _
    %p1283 = scmp.le.s32.totalorder 2, %s9
    // Predicated region
    $region37: #{tpu_custom_call.1} parent=5 // pred_check
      %p1284 = pneg %p1283
    $region38: #{tpu_custom_call.1} parent=5 // pred_check_branch
      %1286 = sbr.rel (%p1284) target = $region40
    $region39: #{tpu_custom_call.1} parent=5 // pred_region
      %s1287 = ssub.s32 %s9, 2
      // Predicated region
      $region41: #{tpu_custom_call.1} parent=39 // pred_check
        %p1288 = pneg %p122
      $region42: #{tpu_custom_call.1} parent=39 // pred_check_branch
        %1290 = sbr.rel (%p1288) target = $region44
      $region43: #{tpu_custom_call.1} parent=39 // pred_region
        %s1291 = smul.u32 2, %s21
        %p1292 = scmp.lt.s32.totalorder %s20, 1
        %s1293 = scalar_select %p1292, %s20, 1
        %p1294 = scmp.lt.s32.totalorder %s1291, 1
        %s1295 = scalar_select %p1294, %s1291, 1
        %s1296 = smul.addr %s1293, 6
        %s1297 = sadd.s32 %s1295, %s1296
        %s1298 = smul.addr %s1297, 8
        %s1299 = scalar_lea.vmem %s3, %s1298
      $region44: #{tpu_custom_call.1} parent=39 // pred_fallthru
        _
    $region40: #{tpu_custom_call.1} parent=5 // pred_fallthru
      _
  $region6: #{tpu_custom_call.1} parent=0 // loop_footer
    %s13 = sadd.s32 1, %s9
  $region7: #{tpu_custom_call.1} parent=0 // loop_footer_branch
    %8 = sbr.rel target = $region3
  $region8: #{tpu_custom_call.1} parent=0 // loop_exit
    _

</llo_original>
